<compile_context>
chip_gen: v7x
topology: tpu7x:2x2x1
jax: 0.10.0
libtpu: 0.0.40
codegen_flags: <defaults>
</compile_context>

<pallas_src>
import functools

import jax
import jax.numpy as jnp
from jax import lax
from jax.experimental import pallas as pl
from jax.experimental.pallas import tpu as pltpu


# ------------------------------ tiling helpers -------------------------------
def _vmem_limit_bytes() -> int:
    """Scoped-VMEM limit: ~3/4 of physical capacity, conservative fallback (v7x)."""
    try:
        cap = int(pltpu.get_tpu_info().vmem_capacity_bytes)
    except Exception:
        cap = 64 * 1024 * 1024          # smallest current generation (v7x per-TC VMEM)
    return min(cap * 3 // 4, 100 * 1024 * 1024)


def _row_tile(nc: int, cap: int = 64) -> int:
    """Largest multiple-of-8 divisor of nc (<= cap), preferring >= 2 row blocks so the
    'parallel' row axis can feed both TensorCores on v7x.  Falls back to full extent."""
    limit = min(cap, nc)
    best = None
    for r in range(8, limit + 1, 8):
        if nc % r == 0:
            if nc // r >= 2:
                best = r
            elif best is None:
                best = r
    return best if best is not None else nc


def _lane_tile(hw: int, rows: int, block_bytes: int, itemsize: int = 4) -> int:
    """Spatial (lane) tile: a multiple of 128 chosen so rows*ts*itemsize ~= block_bytes.
    If hw < 128 the full extent is used (single tile, no masking needed)."""
    if hw < 128:
        return hw
    ts = min(max(block_bytes // (rows * itemsize), 128), hw)
    return max((ts // 128) * 128, 128)


# --------------- kernel 1: global avg & max pooling over spatial -------------
def _pool_kernel(x_ref, avg_ref, max_ref, sum_sc, max_sc, *, hw, ts, need_mask):
    s = pl.program_id(1)
    last = pl.num_programs(1) - 1

    @pl.when(s == 0)
    def _init():
        sum_sc[...] = jnp.zeros_like(sum_sc)
        max_sc[...] = jnp.full_like(max_sc, -jnp.inf)

    rows = sum_sc.shape[0]

    if ts % 128 == 0:
        # Walk the (rows, ts) tile in (rows, 128) lane chunks: all accumulation stays
        # on the VPU; the single cross-lane (XLU) reduce happens once per row block
        # in the finalize branch below.  Keeps live vregs small for multi-MiB tiles.
        if need_mask:
            col0 = s * ts + lax.broadcasted_iota(jnp.int32, (rows, 128), 1)

        def body(k, carry):
            acc, mx = carry
            off = pl.multiple_of(k * 128, 128)
            chunk = x_ref[:, pl.ds(off, 128)]
            if need_mask:
                valid = (col0 + off) < hw          # mask the ragged last spatial tile
                acc = acc + jnp.where(valid, chunk, 0.0)
                mx = jnp.maximum(mx, jnp.where(valid, chunk, -jnp.inf))
            else:
                acc = acc + chunk
                mx = jnp.maximum(mx, chunk)
            return acc, mx

        acc, mx = lax.fori_loop(0, ts // 128, body, (sum_sc[...], max_sc[...]))
        sum_sc[...] = acc
        max_sc[...] = mx
    else:
        # hw < 128: one full-extent lane tile, nothing to mask.
        xb = x_ref[...]
        sum_sc[...] = sum_sc[...] + xb
        max_sc[...] = jnp.maximum(max_sc[...], xb)

    @pl.when(s == last)
    def _finalize():
        avg_ref[...] = jnp.sum(sum_sc[...], axis=-1, keepdims=True) * (1.0 / hw)
        max_ref[...] = jnp.max(max_sc[...], axis=-1, keepdims=True)


# --------------- kernel 2: shared MLP + sigmoid gate (tiny, un-gridded) ------
def _mlp_gate_kernel(avg_ref, max_ref, w1_ref, b1_ref, w2_ref, b2_ref, gate_ref):
    w1 = w1_ref[...]
    b1 = b1_ref[...]
    h_avg = jnp.maximum(jnp.dot(avg_ref[...], w1, preferred_element_type=jnp.float32) + b1, 0.0)
    h_max = jnp.maximum(jnp.dot(max_ref[...], w1, preferred_element_type=jnp.float32) + b1, 0.0)
    # MLP(avg) + MLP(max) == (ReLU(avg@w1+b1) + ReLU(max@w1+b1)) @ w2 + 2*b2
    # -> a single second-layer matmul and a single pass over the weights.
    out = jnp.dot(h_avg + h_max, w2_ref[...], preferred_element_type=jnp.float32) + 2.0 * b2_ref[...]
    # Hand-rolled sigmoid saturates safely in f32 (exp overflow -> gate 0 / underflow -> 1).
    gate_ref[...] = 1.0 / (1.0 + jnp.exp(-out))


# --------------- kernel 3: broadcast channel-gate scale ----------------------
def _scale_kernel(x_ref, gate_ref, o_ref):
    o_ref[...] = x_ref[...] * gate_ref[...]          # (R, TS) * (R, 1)


# ------------------------------------ wrapper --------------------------------
def channel_attention(x_nchw, params, *, block_bytes=4 * 1024 * 1024):
    """ChannelAttention forward.  x_nchw: (N, C, H, W) float32.
    params = (w1, b1, w2, b2): w1:(C,Cr), b1:(1,Cr), w2:(Cr,C), b2:(1,C)
    (w1/w2 are the transposed PyTorch nn.Linear weights)."""
    w1, b1, w2, b2 = params
    x_nchw = x_nchw.astype(jnp.float32)
    N, C, H, W = x_nchw.shape
    NC, HW = N * C, H * W
    x2 = x_nchw.reshape(NC, HW)          # free contiguous view: rows=(n,c), lanes=spatial

    vmem_limit = _vmem_limit_bytes()
    blk = max(min(block_bytes, vmem_limit // 6), 64 * 1024)   # keep 2in+2out buffers < limit
    R = _row_tile(NC)
    ts = _lane_tile(HW, R, blk)
    r_blocks = NC // R
    s_tiles = pl.cdiv(HW, ts)
    need_mask = (HW % ts) != 0
    lw = 128 if ts % 128 == 0 else ts

    pool_params = pltpu.CompilerParams(
        dimension_semantics=("parallel", "arbitrary"),
        vmem_limit_bytes=vmem_limit)
    scale_params = pltpu.CompilerParams(
        dimension_semantics=("parallel", "parallel"),
        vmem_limit_bytes=vmem_limit)

    # --- pooling: one pipelined HBM read of x --------------------------------
    avg, mx = pl.pallas_call(
        functools.partial(_pool_kernel, hw=HW, ts=ts, need_mask=need_mask),
        out_shape=(jax.ShapeDtypeStruct((NC, 1), jnp.float32),
                   jax.ShapeDtypeStruct((NC, 1), jnp.float32)),
        grid=(r_blocks, s_tiles),
        in_specs=[pl.BlockSpec((R, ts), lambda r, s: (r, s))],
        out_specs=(pl.BlockSpec((R, 1), lambda r, s: (r, 0)),
                   pl.BlockSpec((R, 1), lambda r, s: (r, 0))),
        scratch_shapes=[pltpu.VMEM((R, lw), jnp.float32),
                        pltpu.VMEM((R, lw), jnp.float32)],
        compiler_params=pool_params,
    )(x2)

    # --- tiny shared MLP + sigmoid on the pooled (N, C) values ----------------
    vmem = pl.BlockSpec(memory_space=pltpu.MemorySpace.VMEM)
    gate = pl.pallas_call(
        _mlp_gate_kernel,
        out_shape=jax.ShapeDtypeStruct((N, C), jnp.float32),
        in_specs=[vmem] * 6,
        out_specs=vmem,
    )(avg.reshape(N, C), mx.reshape(N, C), w1, b1, w2, b2)

    # --- scale: one read + one write of x, both grid axes parallel ------------
    y2 = pl.pallas_call(
        _scale_kernel,
        out_shape=jax.ShapeDtypeStruct((NC, HW), jnp.float32),
        grid=(r_blocks, s_tiles),
        in_specs=[pl.BlockSpec((R, ts), lambda r, s: (r, s)),
                  pl.BlockSpec((R, 1), lambda r, s: (r, 0))],
        out_specs=pl.BlockSpec((R, ts), lambda r, s: (r, s)),
        compiler_params=scale_params,
    )(x2, gate.reshape(NC, 1))

    return y2.reshape(N, C, H, W)


# ------------------------------ params & reference ---------------------------
def init_params(key, c, reduction_ratio=16):
    """Deterministic synthetic parameters mirroring the PyTorch MLP (weights transposed)."""
    cr = max(c // reduction_ratio, 1)
    k1, k2, k3, k4 = jax.random.split(key, 4)
    w1 = jax.random.normal(k1, (c, cr), jnp.float32) * 0.2    # Linear(C, Cr).weight.T
    b1 = jax.random.normal(k2, (1, cr), jnp.float32) * 0.1
    w2 = jax.random.normal(k3, (cr, c), jnp.float32) * 0.2    # Linear(Cr, C).weight.T
    b2 = jax.random.normal(k4, (1, c), jnp.float32) * 0.1
    return w1, b1, w2, b2


def _ref_channel_attention(x, params):
    """Pure-JAX reference of the PyTorch module for verification."""
    w1, b1, w2, b2 = params
    avg = jnp.mean(x, axis=(2, 3))
    mx = jnp.max(x, axis=(2, 3))

    def mlp(v):
        return jnp.maximum(v @ w1 + b1, 0.0) @ w2 + b2

    gate = jax.nn.sigmoid(mlp(avg) + mlp(mx))
    return x * gate[:, :, None, None]


if __name__ == "__main__":
    key = jax.random.PRNGKey(0)

    def check(n, c, h, w, reduction_ratio, block_bytes=4 * 1024 * 1024, tag=0):
        kx, kp = jax.random.split(jax.random.fold_in(key, tag))
        x = jax.random.normal(kx, (n, c, h, w), jnp.float32)
        params = init_params(kp, c, reduction_ratio)
        out = jax.block_until_ready(channel_attention(x, params, block_bytes=block_bytes))
        assert out.shape == (n, c, h, w), out.shape
        ref = _ref_channel_attention(x, params)
        max_err = float(jnp.max(jnp.abs(out - ref)))
        assert max_err < 1e-3, f"mismatch for {(n, c, h, w)}: {max_err}"

    # Main case (C must be >= reduction_ratio for the PyTorch MLP to be non-degenerate).
    check(2, 64, 32, 32, 16, tag=0)
    # Small block budget -> multiple spatial tiles: exercises the accumulation path.
    check(2, 64, 32, 32, 16, block_bytes=64 * 1024, tag=1)
    # H*W = 144 (not a multiple of 128) -> masked ragged last spatial tile.
    check(1, 32, 12, 12, 16, tag=2)
    # H*W = 64 < 128 -> full-extent lane tile path.
    check(2, 16, 8, 8, 4, tag=3)

    print("KERNEL_OK")
</pallas_src>

<mosaic_0001>
module attributes {stable_mosaic.version = 11 : i64} {
  func.func @_pool_kernel(%arg0: i32, %arg1: i32, %arg2: memref<64x1024xf32, #tpu.memory_space<vmem>>, %arg3: memref<64x1xf32, #tpu.memory_space<vmem>>, %arg4: memref<64x1xf32, #tpu.memory_space<vmem>>, %arg5: memref<64x128xf32, #tpu.memory_space<vmem>>, %arg6: memref<64x128xf32, #tpu.memory_space<vmem>>) attributes {dimension_semantics = [#tpu.dimension_semantics<parallel>, #tpu.dimension_semantics<arbitrary>], iteration_bounds = array<i64: 2, 1>, scalar_prefetch = 0 : i64, scratch_operands = 2 : i64, tpu.core_type = #tpu.core_type<tc>, window_params = [{transform_indices = @transform_0, window_bounds = array<i64: 64, 1024>}, {transform_indices = @transform_1, window_bounds = array<i64: 64, 1>}, {transform_indices = @transform_2, window_bounds = array<i64: 64, 1>}]} {
    %c0_i32 = arith.constant 0 : i32
    %0 = arith.cmpi eq, %arg1, %c0_i32 : i32
    %1 = arith.extui %0 : i1 to i32
    %c0_i32_0 = arith.constant 0 : i32
    %2 = arith.cmpi ne, %1, %c0_i32_0 : i32
    scf.if %2 {
      %cst = arith.constant 0.000000e+00 : f32
      %12 = vector.broadcast %cst : f32 to vector<64x128xf32>
      %c0_12 = arith.constant 0 : index
      %c0_13 = arith.constant 0 : index
      %13 = vector.load %arg5[%c0_12, %c0_13] : memref<64x128xf32, #tpu.memory_space<vmem>>, vector<64x128xf32>
      tpu.vector_store %arg5[%c0_12, %c0_13], %12 {strides = array<i32>} : memref<64x128xf32, #tpu.memory_space<vmem>>, vector<64x128xf32>,
      %cst_14 = arith.constant 0xFF800000 : f32
      %14 = vector.broadcast %cst_14 : f32 to vector<64x128xf32>
      %c0_15 = arith.constant 0 : index
      %c0_16 = arith.constant 0 : index
      %15 = vector.load %arg6[%c0_15, %c0_16] : memref<64x128xf32, #tpu.memory_space<vmem>>, vector<64x128xf32>
      tpu.vector_store %arg6[%c0_15, %c0_16], %14 {strides = array<i32>} : memref<64x128xf32, #tpu.memory_space<vmem>>, vector<64x128xf32>,
    } else {
    }
    %c0 = arith.constant 0 : index
    %c0_1 = arith.constant 0 : index
    %3 = vector.load %arg5[%c0, %c0_1] : memref<64x128xf32, #tpu.memory_space<vmem>>, vector<64x128xf32>
    %c0_2 = arith.constant 0 : index
    %c0_3 = arith.constant 0 : index
    %4 = vector.load %arg6[%c0_2, %c0_3] : memref<64x128xf32, #tpu.memory_space<vmem>>, vector<64x128xf32>
    %c0_i32_4 = arith.constant 0 : i32
    %c8_i32 = arith.constant 8 : i32
    %5 = arith.addi %c0_i32_4, %c8_i32 : i32
    %c1_i32 = arith.constant 1 : i32
    %6:2 = scf.for %arg7 = %c0_i32_4 to %5 step %c1_i32 iter_args(%arg8 = %3, %arg9 = %4) -> (vector<64x128xf32>, vector<64x128xf32>)  : i32 {
      %c128_i32 = arith.constant 128 : i32
      %12 = arith.muli %arg7, %c128_i32 : i32
      %13 = tpu.assume_multiple %12, 128 : i32
      %c0_12 = arith.constant 0 : index
      %14 = arith.index_cast %13 : i32 to index
      %15 = vector.load %arg2[%c0_12, %14] : memref<64x1024xf32, #tpu.memory_space<vmem>>, vector<64x128xf32>
      %16 = arith.addf %arg8, %15 : vector<64x128xf32>
      %17 = arith.maximumf %arg9, %15 : vector<64x128xf32>
      scf.yield %16, %17 : vector<64x128xf32>, vector<64x128xf32>
    }
    %c8_i32_5 = arith.constant 8 : i32
    %c0_6 = arith.constant 0 : index
    %c0_7 = arith.constant 0 : index
    %7 = vector.load %arg5[%c0_6, %c0_7] : memref<64x128xf32, #tpu.memory_space<vmem>>, vector<64x128xf32>
    tpu.vector_store %arg5[%c0_6, %c0_7], %6#0 {strides = array<i32>} : memref<64x128xf32, #tpu.memory_space<vmem>>, vector<64x128xf32>,
    %c0_8 = arith.constant 0 : index
    %c0_9 = arith.constant 0 : index
    %8 = vector.load %arg6[%c0_8, %c0_9] : memref<64x128xf32, #tpu.memory_space<vmem>>, vector<64x128xf32>
    tpu.vector_store %arg6[%c0_8, %c0_9], %6#1 {strides = array<i32>} : memref<64x128xf32, #tpu.memory_space<vmem>>, vector<64x128xf32>,
    %c0_i32_10 = arith.constant 0 : i32
    %9 = arith.cmpi eq, %arg1, %c0_i32_10 : i32
    %10 = arith.extui %9 : i1 to i32
    %c0_i32_11 = arith.constant 0 : i32
    %11 = arith.cmpi ne, %10, %c0_i32_11 : i32
    scf.if %11 {
      %c0_12 = arith.constant 0 : index
      %c0_13 = arith.constant 0 : index
      %12 = vector.load %arg5[%c0_12, %c0_13] : memref<64x128xf32, #tpu.memory_space<vmem>>, vector<64x128xf32>
      %cst = arith.constant dense<0.000000e+00> : vector<64xf32>
      %13 = vector.multi_reduction <add>, %12, %cst [1] : vector<64x128xf32> to vector<64xf32>
      %14 = vector.shape_cast %13 : vector<64xf32> to vector<64x1xf32>
      %cst_14 = arith.constant 9.765625E-4 : f32
      %15 = vector.broadcast %cst_14 : f32 to vector<64x1xf32>
      %16 = arith.mulf %14, %15 : vector<64x1xf32>
      %c0_15 = arith.constant 0 : index
      %c0_16 = arith.constant 0 : index
      %17 = vector.load %arg3[%c0_15, %c0_16] : memref<64x1xf32, #tpu.memory_space<vmem>>, vector<64x1xf32>
      tpu.vector_store %arg3[%c0_15, %c0_16], %16 {strides = array<i32>} : memref<64x1xf32, #tpu.memory_space<vmem>>, vector<64x1xf32>,
      %c0_17 = arith.constant 0 : index
      %c0_18 = arith.constant 0 : index
      %18 = vector.load %arg6[%c0_17, %c0_18] : memref<64x128xf32, #tpu.memory_space<vmem>>, vector<64x128xf32>
      %cst_19 = arith.constant dense<0xFF800000> : vector<64xf32>
      %19 = vector.multi_reduction <maximumf>, %18, %cst_19 [1] : vector<64x128xf32> to vector<64xf32>
      %20 = vector.shape_cast %19 : vector<64xf32> to vector<64x1xf32>
      %c0_20 = arith.constant 0 : index
      %c0_21 = arith.constant 0 : index
      %21 = vector.load %arg4[%c0_20, %c0_21] : memref<64x1xf32, #tpu.memory_space<vmem>>, vector<64x1xf32>
      tpu.vector_store %arg4[%c0_20, %c0_21], %20 {strides = array<i32>} : memref<64x1xf32, #tpu.memory_space<vmem>>, vector<64x1xf32>,
    } else {
    }
    return
  }
  func.func @transform_0(%arg0: i32, %arg1: i32) -> (i32, i32) {
    %c0_i32 = arith.constant 0 : i32
    return %arg0, %arg1 : i32, i32
  }
  func.func @transform_1(%arg0: i32, %arg1: i32) -> (i32, i32) {
    %c0_i32 = arith.constant 0 : i32
    %c0_i32_0 = arith.constant 0 : i32
    return %arg0, %c0_i32 : i32, i32
  }
  func.func @transform_2(%arg0: i32, %arg1: i32) -> (i32, i32) {
    %c0_i32 = arith.constant 0 : i32
    %c0_i32_0 = arith.constant 0 : i32
    return %arg0, %c0_i32 : i32, i32
  }
}

</mosaic_0001>

<llo_original>
// kernel: tpu_custom_call.1
$region0: #{tpu_custom_call.1}
  #allocation0 [shape = 'u32[]', space=smem, size = 0x4, offset = 0x4, fixed_abs, tag = 'smem constant byte address 0x4 - core index']
  #allocation1 [shape = 'u32[144,128]{1,0:T(1,128)}', space=vmem, size = 0x12000, scoped, tag = 'internal scratch']
  #allocation2 [shape = 'f32[64,128]{1,0:T(8,128)}', space=vmem, size = 0x8000, scoped, tag = 'scratch operand']
  #allocation3 [shape = 'f32[64,128]{1,0:T(8,128)}', space=vmem, size = 0x8000, scoped, tag = 'scratch operand']
  %s0 = inlined_call_operand.hbm [shape: f32[128,1024], index: 0, kind: input, shape index: {}]
  %s1 = inlined_call_operand.vmem [shape: f32[128,1], index: 1, kind: output, shape index: {0}]
  %s2 = inlined_call_operand.vmem [shape: f32[128,1], index: 2, kind: output, shape index: {1}]
  %3 = xla_tuple %s1, %s2
  %s4 = sld [smem:[#allocation0]]
  $region64: #{tpu_custom_call.1} parent=0
    _
  %s6 = ssub.s32 1, %s4
  %s7 = scalar_select 0, %s6, %s4
  $region1: #{tpu_custom_call.1} parent=0
    #allocation4 [shape = 'u8[524288]{0}', space=vmem, size = 0x80000, scoped, tag = 'input window, operand 0']
    #allocation5 [shape = 's32[2]{0}', space=sflag, size = 0x8, scoped, tag = 'scoped memory for tpu_custom_call.1']
    %8 = vsyncpa [#allocation5], 0
    %s9 = scalar_lea.sflag [#allocation5], 1
    %10 = vsyncpa %s9, 0
    loop: start=0, step=1, limit=4
    $region2: #{tpu_custom_call.1} parent=1 // loop_pre_header
      _
    $region3: #{tpu_custom_call.1} parent=1 // loop_header
      %s12 = sphi 0, %s16
      %p13 = scmp.ge.s32.totalorder %s12, 4
      %s19 = sphi 0, %s31
      %s20 = sphi 0, %s27
      %s21 = sphi 0, %s19
      %s22 = sphi 0, %s20
      %s23 = sphi 0, %s21
      %s24 = sphi 0, %s22
      %s36 = sphi 0, %s38
      %s39 = sphi 0, %s36
      %s40 = sphi 0, %s39
      %s56 = sphi 0, %s40
      %s62 = sphi 0, %s64
      %s65 = sphi 0, %s62
      %s66 = sphi 0, %s65
      %s82 = sphi 0, %s66
      %s88 = sphi 0, %s90
      %s91 = sphi 0, %s88
      %s92 = sphi 0, %s91
      %s108 = sphi 0, %s92
    $region4: #{tpu_custom_call.1} parent=1 // loop_header_branch
      %15 = sbr.rel (%p13) target = $region8
    $region5: #{tpu_custom_call.1} parent=1 // loop_body
      %s17 = ssub.s32 %s12, 1
      %s18 = ssub.s32 %s12, 2
      %s25 = sadd.s32 1, %s20
      %p26 = scmp.ge.s32.totalorder %s25, 1
      %s27 = scalar_select %p26, 0, %s25
      %s28 = sadd.s32 1, %s19
      %s29 = scalar_select %p26, %s28, %s19
      %p30 = scmp.ge.s32.totalorder %s29, 2
      %s31 = scalar_select %p30, 0, %s29
      %s32 = ssub.s32 %s19, %s31
      %s33 = ssub.s32 %s20, %s27
      %s34 = sor.u32 %s32, %s33
      %p35 = scmp.eq.s32.totalorder %s34, 0
      %s37 = sadd.s32 %s36, 1
      %s38 = scalar_select %p35, %s36, %s37
      %p41 = pneg %p35
      %p42 = scmp.eq.s32.totalorder %s12, 1
      %p43 = por %p41, %p42
      %p44 = scmp.ne.s32.totalorder %s36, %s39
      %p45 = scmp.eq.s32.totalorder %s12, 0
      %p46 = por %p44, %p45
      %p47 = scmp.ne.s32.totalorder %s36, %s39
      %p48 = scmp.eq.s32.totalorder %s17, 1
      %p49 = por %p47, %p48
      %p50 = scmp.ne.s32.totalorder %s39, %s40
      %p51 = scmp.eq.s32.totalorder %s17, 0
      %p52 = por %p50, %p51
      %p53 = scmp.ne.s32.totalorder %s39, %s40
      %p54 = scmp.eq.s32.totalorder %s18, 1
      %p55 = por %p53, %p54
      %p57 = scmp.ne.s32.totalorder %s40, %s56
      %p58 = scmp.eq.s32.totalorder %s18, 0
      %p59 = por %p57, %p58
      %s60 = ssub.s32 %s19, %s31
      %p61 = scmp.eq.s32.totalorder %s60, 0
      %s63 = sadd.s32 %s62, 1
      %s64 = scalar_select %p61, %s62, %s63
      %p67 = pneg %p61
      %p68 = scmp.eq.s32.totalorder %s12, 1
      %p69 = por %p67, %p68
      %p70 = scmp.ne.s32.totalorder %s62, %s65
      %p71 = scmp.eq.s32.totalorder %s12, 0
      %p72 = por %p70, %p71
      %p73 = scmp.ne.s32.totalorder %s62, %s65
      %p74 = scmp.eq.s32.totalorder %s17, 1
      %p75 = por %p73, %p74
      %p76 = scmp.ne.s32.totalorder %s65, %s66
      %p77 = scmp.eq.s32.totalorder %s17, 0
      %p78 = por %p76, %p77
      %p79 = scmp.ne.s32.totalorder %s65, %s66
      %p80 = scmp.eq.s32.totalorder %s18, 1
      %p81 = por %p79, %p80
      %p83 = scmp.ne.s32.totalorder %s66, %s82
      %p84 = scmp.eq.s32.totalorder %s18, 0
      %p85 = por %p83, %p84
      %s86 = ssub.s32 %s19, %s31
      %p87 = scmp.eq.s32.totalorder %s86, 0
      %s89 = sadd.s32 %s88, 1
      %s90 = scalar_select %p87, %s88, %s89
      %p93 = pneg %p87
      %p94 = scmp.eq.s32.totalorder %s12, 1
      %p95 = por %p93, %p94
      %p96 = scmp.ne.s32.totalorder %s88, %s91
      %p97 = scmp.eq.s32.totalorder %s12, 0
      %p98 = por %p96, %p97
      %p99 = scmp.ne.s32.totalorder %s88, %s91
      %p100 = scmp.eq.s32.totalorder %s17, 1
      %p101 = por %p99, %p100
      %p102 = scmp.ne.s32.totalorder %s91, %s92
      %p103 = scmp.eq.s32.totalorder %s17, 0
      %p104 = por %p102, %p103
      %p105 = scmp.ne.s32.totalorder %s91, %s92
      %p106 = scmp.eq.s32.totalorder %s18, 1
      %p107 = por %p105, %p106
      %p109 = scmp.ne.s32.totalorder %s92, %s108
      %p110 = scmp.eq.s32.totalorder %s18, 0
      %p111 = por %p109, %p110
      %p112 = scmp.le.s32.totalorder 1, %s12
      %p113 = scmp.lt.s32.totalorder %s12, 3
      %p114 = pnand %p112, %p113
      %p115 = pneg %p114
      // Predicated region
      $region9: #{tpu_custom_call.1} parent=5 // pred_check
        _
      $region10: #{tpu_custom_call.1} parent=5 // pred_check_branch
        %117 = sbr.rel (%p114) target = $region12
      $region11: #{tpu_custom_call.1} parent=5 // pred_region
        %s118 = ssub.s32 %s12, 1
      $region12: #{tpu_custom_call.1} parent=5 // pred_fallthru
        _
      %p119 = scmp.lt.s32.totalorder %s12, 2
      // Predicated region
      $region13: #{tpu_custom_call.1} parent=5 // pred_check
        %p120 = pneg %p119
      $region14: #{tpu_custom_call.1} parent=5 // pred_check_branch
        %122 = sbr.rel (%p120) target = $region16
      $region15: #{tpu_custom_call.1} parent=5 // pred_region
        // Predicated region
        $region17: #{tpu_custom_call.1} parent=15 // pred_check
          %p123 = pneg %p46
        $region18: #{tpu_custom_call.1} parent=15 // pred_check_branch
          %125 = sbr.rel (%p123) target = $region20
        $region19: #{tpu_custom_call.1} parent=15 // pred_region
          %s126 = sand.u32 %s36, 1
          %s127 = scalar_lea.sflag [#allocation5], %s126
          %s128 = sand.u32 %s36, 1
          %s129 = smul.addr %s128, 512
          %s130 = scalar_lea.vmem [#allocation4], %s129
          %s131 = smul.u32 8, %s19
          %s132 = smul.u32 8, %s20
          %s134 = ssub.s32 8192, 8192
          %135 = vsyncadd %s127, %s134
          %s136 = smul.addr %s131, 8
          %s137 = sadd.s32 %s132, %s136
          %s138 = smul.addr %s137, 128
          %s139 = scalar_lea.hbm %s0, %s138
          %s140 = sshll.u32 %s130, 4
          %s141 = int_to_ptr.vmem [resolvable:$true] %s140
          %146 = dma.hbm_to_vmem [thread:$0]  %s139, 8192, %s141, %s127, 1024, 1024, 64
        $region20: #{tpu_custom_call.1} parent=15 // pred_fallthru
          _
      $region16: #{tpu_custom_call.1} parent=5 // pred_fallthru
        _
      %p147 = scmp.le.s32.totalorder 1, %s12
      %p148 = scmp.lt.s32.totalorder %s12, 3
      %p149 = pnand %p147, %p148
      %p150 = pneg %p149
      // Predicated region
      $region21: #{tpu_custom_call.1} parent=5 // pred_check
        _
      $region22: #{tpu_custom_call.1} parent=5 // pred_check_branch
        %152 = sbr.rel (%p149) target = $region24
      $region23: #{tpu_custom_call.1} parent=5 // pred_region
        %s153 = ssub.s32 %s12, 1
        %s154 = sand.u32 %s39, 1
        %s155 = scalar_lea.sflag [#allocation5], %s154
        %s156 = sand.u32 %s39, 1
        %s157 = smul.addr %s156, 512
        %s158 = scalar_lea.vmem [#allocation4], %s157
        // Predicated region
        $region25: #{tpu_custom_call.1} parent=23 // pred_check
          %p159 = pneg %p52
        $region26: #{tpu_custom_call.1} parent=23 // pred_check_branch
          %161 = sbr.rel (%p159) target = $region28
        $region27: #{tpu_custom_call.1} parent=23 // pred_region
          %162 = dma.done %s155, 8192
        $region28: #{tpu_custom_call.1} parent=23 // pred_fallthru
          _
        %s163 = sand.u32 %s39, 1
        %s164 = scalar_lea.sflag [#allocation5], %s163
        %s165 = sand.u32 %s39, 1
        %s166 = smul.addr %s165, 512
        %s167 = scalar_lea.vmem [#allocation4], %s166
        %p168 = pneg %p52
        %p169 = pneg %p49
        %p170 = pneg %p78
        %p171 = pneg %p75
        %s172 = smul.u32 8, %s21
        %p173 = scmp.lt.s32.totalorder %s172, 15
        %s174 = scalar_select %p173, %s172, 15
        %s175 = smul.addr %s174, 8
        %s176 = scalar_lea.vmem %s1, %s175
        %p177 = pneg %p104
        %p178 = pneg %p101
        %s179 = smul.u32 8, %s21
        %p180 = scmp.lt.s32.totalorder %s179, 15
        %s181 = scalar_select %p180, %s179, 15
        %s182 = smul.addr %s181, 8
        %s183 = scalar_lea.vmem %s2, %s182
        %s184 = smul.u32 8, %s21
        %s185 = smul.u32 8, %s22
        %s186 = smul.u32 8, %s21
        %p187 = scmp.lt.s32.totalorder %s186, 15
        %s188 = scalar_select %p187, %s186, 15
        %s189 = smul.addr %s188, 8
        %s190 = scalar_lea.vmem %s1, %s189
        %s191 = smul.u32 8, %s21
        %s192 = smul.u32 8, %s21
        %p193 = scmp.lt.s32.totalorder %s192, 15
        %s194 = scalar_select %p193, %s192, 15
        %s195 = smul.addr %s194, 8
        %s196 = scalar_lea.vmem %s2, %s195
        %s197 = smul.u32 8, %s21
        %p198 = scmp.eq.s32.totalorder %s22, 0
        // Predicated region
        $region29: #{tpu_custom_call.1} parent=23 // pred_check
          %p199 = pneg %p198
        $region30: #{tpu_custom_call.1} parent=23 // pred_check_branch
          %201 = sbr.rel (%p199) target = $region32
        $region31: #{tpu_custom_call.1} parent=23 // pred_region
          %202 = vst [vmem:[#allocation2] sm:$0xff] 0.0
          %203 = vst [vmem:[#allocation2 + $0x8] sm:$0xff] 0.0
          %204 = vst [vmem:[#allocation2 + $0x10] sm:$0xff] 0.0
          %205 = vst [vmem:[#allocation2 + $0x18] sm:$0xff] 0.0
          %206 = vst [vmem:[#allocation2 + $0x20] sm:$0xff] 0.0
          %207 = vst [vmem:[#allocation2 + $0x28] sm:$0xff] 0.0
          %208 = vst [vmem:[#allocation2 + $0x30] sm:$0xff] 0.0
          %209 = vst [vmem:[#allocation2 + $0x38] sm:$0xff] 0.0
          %210 = vst [vmem:[#allocation3] sm:$0xff] -inf
          %211 = vst [vmem:[#allocation3 + $0x8] sm:$0xff] -inf
          %212 = vst [vmem:[#allocation3 + $0x10] sm:$0xff] -inf
          %213 = vst [vmem:[#allocation3 + $0x18] sm:$0xff] -inf
          %214 = vst [vmem:[#allocation3 + $0x20] sm:$0xff] -inf
          %215 = vst [vmem:[#allocation3 + $0x28] sm:$0xff] -inf
          %216 = vst [vmem:[#allocation3 + $0x30] sm:$0xff] -inf
          %217 = vst [vmem:[#allocation3 + $0x38] sm:$0xff] -inf
        $region32: #{tpu_custom_call.1} parent=23 // pred_fallthru
          _
        %v218 = vld [vmem:[#allocation2] sm:$0xff]
        %v219 = vld [vmem:[#allocation2 + $0x8] sm:$0xff]
        %v220 = vld [vmem:[#allocation2 + $0x10] sm:$0xff]
        %v221 = vld [vmem:[#allocation2 + $0x18] sm:$0xff]
        %v222 = vld [vmem:[#allocation2 + $0x20] sm:$0xff]
        %v223 = vld [vmem:[#allocation2 + $0x28] sm:$0xff]
        %v224 = vld [vmem:[#allocation2 + $0x30] sm:$0xff]
        %v225 = vld [vmem:[#allocation2 + $0x38] sm:$0xff]
        %v226 = vld [vmem:[#allocation3] sm:$0xff]
        %v227 = vld [vmem:[#allocation3 + $0x8] sm:$0xff]
        %v228 = vld [vmem:[#allocation3 + $0x10] sm:$0xff]
        %v229 = vld [vmem:[#allocation3 + $0x18] sm:$0xff]
        %v230 = vld [vmem:[#allocation3 + $0x20] sm:$0xff]
        %v231 = vld [vmem:[#allocation3 + $0x28] sm:$0xff]
        %v232 = vld [vmem:[#allocation3 + $0x30] sm:$0xff]
        %v233 = vld [vmem:[#allocation3 + $0x38] sm:$0xff]
        loop: start=0, step=1, limit=8
        $region33: #{tpu_custom_call.1} parent=23 // loop_pre_header
          _
        $region34: #{tpu_custom_call.1} parent=23 // loop_header
          %s235 = sphi 0, %s239
          %p236 = scmp.ge.s32.totalorder %s235, 8
          %v240 = vphi %v218, %v269
          %v241 = vphi %v219, %v270
          %v242 = vphi %v220, %v271
          %v243 = vphi %v221, %v272
          %v244 = vphi %v222, %v273
          %v245 = vphi %v223, %v274
          %v246 = vphi %v224, %v275
          %v247 = vphi %v225, %v276
          %v248 = vphi %v226, %v277
          %v249 = vphi %v227, %v278
          %v250 = vphi %v228, %v279
          %v251 = vphi %v229, %v280
          %v252 = vphi %v230, %v281
          %v253 = vphi %v231, %v282
          %v254 = vphi %v232, %v283
          %v255 = vphi %v233, %v284
        $region35: #{tpu_custom_call.1} parent=23 // loop_header_branch
          %238 = sbr.rel (%p236) target = $region39
        $region36: #{tpu_custom_call.1} parent=23 // loop_body
          %s256 = smul.u32 %s235, 128
          %s257 = sshra.s32 %s256, 7
          %s258 = sand.u32 %s256, 127
          %s259 = smul.addr %s257, 8
          %s260 = scalar_lea.vmem %s158, %s259 [#allocation4]
          %v261 = vld [vmem:[%s260] sm:$0xff]
          %v262 = vld [vmem:[%s260 + $0x40] sm:$0xff]
          %v263 = vld [vmem:[%s260 + $0x80] sm:$0xff]
          %v264 = vld [vmem:[%s260 + $0xc0] sm:$0xff]
          %v265 = vld [vmem:[%s260 + $0x100] sm:$0xff]
          %v266 = vld [vmem:[%s260 + $0x140] sm:$0xff]
          %v267 = vld [vmem:[%s260 + $0x180] sm:$0xff]
          %v268 = vld [vmem:[%s260 + $0x1c0] sm:$0xff]
          %v269 = vadd.f32 %v240, %v261
          %v270 = vadd.f32 %v241, %v262
          %v271 = vadd.f32 %v242, %v263
          %v272 = vadd.f32 %v243, %v264
          %v273 = vadd.f32 %v244, %v265
          %v274 = vadd.f32 %v245, %v266
          %v275 = vadd.f32 %v246, %v267
          %v276 = vadd.f32 %v247, %v268
          %v277 = vmax.f32 %v248, %v261
          %v278 = vmax.f32 %v249, %v262
          %v279 = vmax.f32 %v250, %v263
          %v280 = vmax.f32 %v251, %v264
          %v281 = vmax.f32 %v252, %v265
          %v282 = vmax.f32 %v253, %v266
          %v283 = vmax.f32 %v254, %v267
          %v284 = vmax.f32 %v255, %v268
        $region37: #{tpu_custom_call.1} parent=23 // loop_footer
          %s239 = sadd.s32 1, %s235
        $region38: #{tpu_custom_call.1} parent=23 // loop_footer_branch
          %234 = sbr.rel target = $region34
        $region39: #{tpu_custom_call.1} parent=23 // loop_exit
          _
        %285 = vst [vmem:[#allocation2] sm:$0xff] %v240
        %286 = vst [vmem:[#allocation2 + $0x8] sm:$0xff] %v241
        %287 = vst [vmem:[#allocation2 + $0x10] sm:$0xff] %v242
        %288 = vst [vmem:[#allocation2 + $0x18] sm:$0xff] %v243
        %289 = vst [vmem:[#allocation2 + $0x20] sm:$0xff] %v244
        %290 = vst [vmem:[#allocation2 + $0x28] sm:$0xff] %v245
        %291 = vst [vmem:[#allocation2 + $0x30] sm:$0xff] %v246
        %292 = vst [vmem:[#allocation2 + $0x38] sm:$0xff] %v247
        %293 = vst [vmem:[#allocation3] sm:$0xff] %v248
        %294 = vst [vmem:[#allocation3 + $0x8] sm:$0xff] %v249
        %295 = vst [vmem:[#allocation3 + $0x10] sm:$0xff] %v250
        %296 = vst [vmem:[#allocation3 + $0x18] sm:$0xff] %v251
        %297 = vst [vmem:[#allocation3 + $0x20] sm:$0xff] %v252
        %298 = vst [vmem:[#allocation3 + $0x28] sm:$0xff] %v253
        %299 = vst [vmem:[#allocation3 + $0x30] sm:$0xff] %v254
        %300 = vst [vmem:[#allocation3 + $0x38] sm:$0xff] %v255
        // Predicated region
        $region40: #{tpu_custom_call.1} parent=23 // pred_check
          %p301 = pneg %p198
        $region41: #{tpu_custom_call.1} parent=23 // pred_check_branch
          %303 = sbr.rel (%p301) target = $region43
        $region42: #{tpu_custom_call.1} parent=23 // pred_region
          %v304 = vld [vmem:[#allocation2] sm:$0xff]
          %v305 = vld [vmem:[#allocation2 + $0x8] sm:$0xff]
          %v306 = vld [vmem:[#allocation2 + $0x10] sm:$0xff]
          %v307 = vld [vmem:[#allocation2 + $0x18] sm:$0xff]
          %v308 = vld [vmem:[#allocation2 + $0x20] sm:$0xff]
          %v309 = vld [vmem:[#allocation2 + $0x28] sm:$0xff]
          %v310 = vld [vmem:[#allocation2 + $0x30] sm:$0xff]
          %v311 = vld [vmem:[#allocation2 + $0x38] sm:$0xff]
          %312 = vadd.xlane.f32.xlu0 %v304
          %v313 = vpop.xlane.xlu0 %312
          %314 = vadd.xlane.f32.xlu0 %v305
          %v315 = vpop.xlane.xlu0 %314
          %316 = vadd.xlane.f32.xlu0 %v306
          %v317 = vpop.xlane.xlu0 %316
          %318 = vadd.xlane.f32.xlu0 %v307
          %v319 = vpop.xlane.xlu0 %318
          %320 = vadd.xlane.f32.xlu0 %v308
          %v321 = vpop.xlane.xlu0 %320
          %322 = vadd.xlane.f32.xlu0 %v309
          %v323 = vpop.xlane.xlu0 %322
          %324 = vadd.xlane.f32.xlu0 %v310
          %v325 = vpop.xlane.xlu0 %324
          %326 = vadd.xlane.f32.xlu0 %v311
          %v327 = vpop.xlane.xlu0 %326
          %v328 = vmul.f32 %v313, 0.0009765625
          %v329 = vmul.f32 %v315, 0.0009765625
          %v330 = vmul.f32 %v317, 0.0009765625
          %v331 = vmul.f32 %v319, 0.0009765625
          %v332 = vmul.f32 %v321, 0.0009765625
          %v333 = vmul.f32 %v323, 0.0009765625
          %v334 = vmul.f32 %v325, 0.0009765625
          %v335 = vmul.f32 %v327, 0.0009765625
          %vm336 = vcmask 7168
          %337 = vst.msk [vmem:[%s190] sm:$0xff] %vm336, %v328
          %338 = vst.msk [vmem:[%s190 + $0x8] sm:$0xff] %vm336, %v329
          %339 = vst.msk [vmem:[%s190 + $0x10] sm:$0xff] %vm336, %v330
          %340 = vst.msk [vmem:[%s190 + $0x18] sm:$0xff] %vm336, %v331
          %341 = vst.msk [vmem:[%s190 + $0x20] sm:$0xff] %vm336, %v332
          %342 = vst.msk [vmem:[%s190 + $0x28] sm:$0xff] %vm336, %v333
          %343 = vst.msk [vmem:[%s190 + $0x30] sm:$0xff] %vm336, %v334
          %344 = vst.msk [vmem:[%s190 + $0x38] sm:$0xff] %vm336, %v335
          %v345 = vld [vmem:[#allocation3] sm:$0xff]
          %v346 = vld [vmem:[#allocation3 + $0x8] sm:$0xff]
          %v347 = vld [vmem:[#allocation3 + $0x10] sm:$0xff]
          %v348 = vld [vmem:[#allocation3 + $0x18] sm:$0xff]
          %v349 = vld [vmem:[#allocation3 + $0x20] sm:$0xff]
          %v350 = vld [vmem:[#allocation3 + $0x28] sm:$0xff]
          %v351 = vld [vmem:[#allocation3 + $0x30] sm:$0xff]
          %v352 = vld [vmem:[#allocation3 + $0x38] sm:$0xff]
          %353 = vmax.xlane.f32.xlu0 %v345
          %v354 = vpop.xlane.xlu0 %353
          %355 = vmax.xlane.f32.xlu0 %v346
          %v356 = vpop.xlane.xlu0 %355
          %357 = vmax.xlane.f32.xlu0 %v347
          %v358 = vpop.xlane.xlu0 %357
          %359 = vmax.xlane.f32.xlu0 %v348
          %v360 = vpop.xlane.xlu0 %359
          %361 = vmax.xlane.f32.xlu0 %v349
          %v362 = vpop.xlane.xlu0 %361
          %363 = vmax.xlane.f32.xlu0 %v350
          %v364 = vpop.xlane.xlu0 %363
          %365 = vmax.xlane.f32.xlu0 %v351
          %v366 = vpop.xlane.xlu0 %365
          %367 = vmax.xlane.f32.xlu0 %v352
          %v368 = vpop.xlane.xlu0 %367
          %369 = vst.msk [vmem:[%s196] sm:$0xff] %vm336, %v354
          %370 = vst.msk [vmem:[%s196 + $0x8] sm:$0xff] %vm336, %v356
          %371 = vst.msk [vmem:[%s196 + $0x10] sm:$0xff] %vm336, %v358
          %372 = vst.msk [vmem:[%s196 + $0x18] sm:$0xff] %vm336, %v360
          %373 = vst.msk [vmem:[%s196 + $0x20] sm:$0xff] %vm336, %v362
          %374 = vst.msk [vmem:[%s196 + $0x28] sm:$0xff] %vm336, %v364
          %375 = vst.msk [vmem:[%s196 + $0x30] sm:$0xff] %vm336, %v366
          %376 = vst.msk [vmem:[%s196 + $0x38] sm:$0xff] %vm336, %v368
        $region43: #{tpu_custom_call.1} parent=23 // pred_fallthru
          _
        %s377 = smul.u32 8, %s21
        %p378 = scmp.lt.s32.totalorder %s377, 15
        %s379 = scalar_select %p378, %s377, 15
        %s380 = smul.addr %s379, 8
        %s381 = scalar_lea.vmem %s1, %s380
        %s382 = smul.u32 8, %s21
        %p383 = scmp.lt.s32.totalorder %s382, 15
        %s384 = scalar_select %p383, %s382, 15
        %s385 = smul.addr %s384, 8
        %s386 = scalar_lea.vmem %s2, %s385
        // Predicated region
        $region44: #{tpu_custom_call.1} parent=23 // pred_check
          %p387 = pneg %p75
        $region45: #{tpu_custom_call.1} parent=23 // pred_check_branch
          %389 = sbr.rel (%p387) target = $region47
        $region46: #{tpu_custom_call.1} parent=23 // pred_region
          %s390 = smul.u32 8, %s21
        $region47: #{tpu_custom_call.1} parent=23 // pred_fallthru
          _
        // Predicated region
        $region48: #{tpu_custom_call.1} parent=23 // pred_check
          %p391 = pneg %p101
        $region49: #{tpu_custom_call.1} parent=23 // pred_check_branch
          %393 = sbr.rel (%p391) target = $region51
        $region50: #{tpu_custom_call.1} parent=23 // pred_region
          %s394 = smul.u32 8, %s21
        $region51: #{tpu_custom_call.1} parent=23 // pred_fallthru
          _
      $region24: #{tpu_custom_call.1} parent=5 // pred_fallthru
        _
      %p395 = scmp.le.s32.totalorder 2, %s12
      // Predicated region
      $region52: #{tpu_custom_call.1} parent=5 // pred_check
        %p396 = pneg %p395
      $region53: #{tpu_custom_call.1} parent=5 // pred_check_branch
        %398 = sbr.rel (%p396) target = $region55
      $region54: #{tpu_custom_call.1} parent=5 // pred_region
        %s399 = ssub.s32 %s12, 2
        // Predicated region
        $region56: #{tpu_custom_call.1} parent=54 // pred_check
          %p400 = pneg %p81
        $region57: #{tpu_custom_call.1} parent=54 // pred_check_branch
          %402 = sbr.rel (%p400) target = $region59
        $region58: #{tpu_custom_call.1} parent=54 // pred_region
          %s403 = smul.u32 8, %s23
          %p404 = scmp.lt.s32.totalorder %s403, 15
          %s405 = scalar_select %p404, %s403, 15
          %s406 = smul.addr %s405, 8
          %s407 = scalar_lea.vmem %s1, %s406
        $region59: #{tpu_custom_call.1} parent=54 // pred_fallthru
          _
        // Predicated region
        $region60: #{tpu_custom_call.1} parent=54 // pred_check
          %p408 = pneg %p107
        $region61: #{tpu_custom_call.1} parent=54 // pred_check_branch
          %410 = sbr.rel (%p408) target = $region63
        $region62: #{tpu_custom_call.1} parent=54 // pred_region
          %s411 = smul.u32 8, %s23
          %p412 = scmp.lt.s32.totalorder %s411, 15
          %s413 = scalar_select %p412, %s411, 15
          %s414 = smul.addr %s413, 8
          %s415 = scalar_lea.vmem %s2, %s414
        $region63: #{tpu_custom_call.1} parent=54 // pred_fallthru
          _
      $region55: #{tpu_custom_call.1} parent=5 // pred_fallthru
        _
    $region6: #{tpu_custom_call.1} parent=1 // loop_footer
      %s16 = sadd.s32 1, %s12
    $region7: #{tpu_custom_call.1} parent=1 // loop_footer_branch
      %11 = sbr.rel target = $region3
    $region8: #{tpu_custom_call.1} parent=1 // loop_exit
      _
    %416 = vsyncpa [#allocation5], 1
    %s417 = scalar_lea.sflag [#allocation5], 1
    %418 = vsyncpa %s417, 1

</llo_original>
